<compile_context>
chip_gen: v5e
topology: v5e:2x2
jax: 0.10.0
libtpu: 0.0.40
codegen_flags: <defaults>
</compile_context>

<pallas_src>
import jax
import jax.numpy as jnp
from jax.experimental import pallas as pl
from jax.experimental.pallas import tpu as pltpu

V_TH = 1.0
BN_EPS = 1e-3

_ROW_BLOCK_CAP = 256     # rows (batch*C) per grid step (multiple of 8)
_LANE_BLOCK_CAP = 2048   # cols (H*W) per grid step (multiple of 128)


def _round_up(a, b):
    return (a + b - 1) // b * b


# --------------------------------- kernels ------------------------------------

def bnlif_kernel(x_ref, sgn_ref, thr_ref, o_ref):
    """spike = heaviside(BN(x) - V_th) with BN folded into the threshold.

    x_ref:   [BR, BL]  activation block (row = flattened (batch, channel))
    sgn_ref: [BR, 1]   sign(bn_scale) per row
    thr_ref: [BR, 1]   sign(bn_scale) * (V_th - bn_shift) / bn_scale per row
    (bn_scale * x + bn_shift > V_th  <=>  sign(s)*x > sign(s)*(V_th-b)/s)
    """
    x = x_ref[...]
    spike = jnp.where(x * sgn_ref[...] > thr_ref[...], 1.0, 0.0)
    o_ref[...] = spike.astype(o_ref.dtype)


def bn_kernel(x_ref, scale_ref, shift_ref, o_ref):
    """BN only (the lif_acti=False path of BNLIF)."""
    o_ref[...] = (x_ref[...] * scale_ref[...] + shift_ref[...]).astype(o_ref.dtype)


# --------------------------------- wrapper ------------------------------------

def _pallas_rowwise(kernel, x2d, row_a, row_b):
    """Run `kernel` over an [R, L] slab with per-row [R, 1] parameters."""
    R, L = x2d.shape

    BL = min(_round_up(L, 128), _LANE_BLOCK_CAP)
    Lp = _round_up(L, BL)
    BR = min(_round_up(R, 8), _ROW_BLOCK_CAP)
    Rp = _round_up(R, BR)

    if (Rp, Lp) != (R, L):
        x2d = jnp.pad(x2d, ((0, Rp - R), (0, Lp - L)))
    if Rp != R:
        row_a = jnp.pad(row_a, ((0, Rp - R), (0, 0)))
        row_b = jnp.pad(row_b, ((0, Rp - R), (0, 0)))

    grid = (Rp // BR, Lp // BL)
    out = pl.pallas_call(
        kernel,
        out_shape=jax.ShapeDtypeStruct((Rp, Lp), jnp.float32),
        grid=grid,
        in_specs=[
            pl.BlockSpec((BR, BL), lambda i, j: (i, j)),
            pl.BlockSpec((BR, 1), lambda i, j: (i, 0)),
            pl.BlockSpec((BR, 1), lambda i, j: (i, 0)),
        ],
        out_specs=pl.BlockSpec((BR, BL), lambda i, j: (i, j)),
        compiler_params=pltpu.CompilerParams(
            dimension_semantics=("parallel", "parallel"),
            vmem_limit_bytes=32 << 20,
        ),
    )(x2d, row_a, row_b)
    return out[:R, :L]


def bnlif_forward(x, params, lif=True):
    """x: [..., C, H, W] float32 (PyTorch layout; any leading time/batch dims)."""
    gamma, beta, mean, var = params
    *lead, C, H, W = x.shape
    B = 1
    for d in lead:
        B *= d
    R, L = B * C, H * W

    # Fold BatchNorm2d (inference mode, eps=1e-3) to per-channel scale/shift.
    scale = gamma / jnp.sqrt(var + BN_EPS)      # [C]
    shift = beta - mean * scale                 # [C]

    x2d = x.reshape(R, L).astype(jnp.float32)

    if lif:
        # Fold BN into the LIF threshold, sign-aware (handles scale < 0 and == 0).
        safe = jnp.where(scale == 0.0, 1.0, scale)
        sgn = jnp.sign(scale)
        thr = sgn * (V_TH - shift) / safe
        # scale == 0: spike iff shift > V_th (constant); encode via 0 > thr.
        thr = jnp.where(scale == 0.0, jnp.where(shift > V_TH, -1.0, 1.0), thr)
        a = jnp.tile(sgn, B).reshape(R, 1).astype(jnp.float32)
        b = jnp.tile(thr, B).reshape(R, 1).astype(jnp.float32)
        out = _pallas_rowwise(bnlif_kernel, x2d, a, b)
    else:
        a = jnp.tile(scale, B).reshape(R, 1).astype(jnp.float32)
        b = jnp.tile(shift, B).reshape(R, 1).astype(jnp.float32)
        out = _pallas_rowwise(bn_kernel, x2d, a, b)

    return out.reshape(x.shape)


# ------------------------------ pure-JAX reference -----------------------------

def bnlif_reference(x, params, lif=True):
    gamma, beta, mean, var = params
    scale = gamma / jnp.sqrt(var + BN_EPS)
    shift = beta - mean * scale
    y = x * scale[:, None, None] + shift[:, None, None]
    if lif:
        y = jnp.where(y > V_TH, 1.0, 0.0)
    return y


# ------------------------------------ main -------------------------------------

if __name__ == "__main__":
    # rows = N*C = 512, lanes = H*W = 512  ->  grid (2, 1), 1 MiB total
    N, C, H, W = 4, 128, 16, 32
    key = jax.random.PRNGKey(0)
    kx, kg, kb, km, kv = jax.random.split(key, 5)
    x = jax.random.normal(kx, (N, C, H, W), jnp.float32)
    gamma = 1.0 + 0.1 * jax.random.normal(kg, (C,), jnp.float32)
    beta = 0.5 + 0.1 * jax.random.normal(kb, (C,), jnp.float32)
    mean = 0.1 * jax.random.normal(km, (C,), jnp.float32)
    var = 1.0 + 0.1 * jax.random.uniform(kv, (C,), jnp.float32)
    params = (gamma, beta, mean, var)

    # default path: BN + LIF
    out = jax.block_until_ready(bnlif_forward(x, params, lif=True))
    ref = bnlif_reference(x, params, lif=True)
    assert out.shape == x.shape, out.shape
    assert bool(jnp.all(jnp.isfinite(out)))
    # Folded-threshold compare can differ from mul+add+compare only for values
    # within rounding distance of the threshold (measure-zero for this data).
    mismatch = int(jnp.sum(jnp.abs(out - ref) > 0))
    assert mismatch <= 8, f"too many threshold mismatches: {mismatch}"

    # lif_acti=False path: BN only
    out_bn = jax.block_until_ready(bnlif_forward(x, params, lif=False))
    ref_bn = bnlif_reference(x, params, lif=False)
    assert bool(jnp.allclose(out_bn, ref_bn, atol=1e-5, rtol=1e-5))

    print("KERNEL_OK")
</pallas_src>

<mosaic_0001>
module attributes {stable_mosaic.version = 11 : i64} {
  func.func @bnlif_kernel(%arg0: i32, %arg1: i32, %arg2: memref<256x512xf32, #tpu.memory_space<vmem>>, %arg3: memref<256x1xf32, #tpu.memory_space<vmem>>, %arg4: memref<256x1xf32, #tpu.memory_space<vmem>>, %arg5: memref<256x512xf32, #tpu.memory_space<vmem>>) attributes {dimension_semantics = [#tpu.dimension_semantics<parallel>, #tpu.dimension_semantics<parallel>], iteration_bounds = array<i64: 2, 1>, scalar_prefetch = 0 : i64, scratch_operands = 0 : i64, tpu.core_type = #tpu.core_type<tc>, window_params = [{transform_indices = @transform_0, window_bounds = array<i64: 256, 512>}, {transform_indices = @transform_1, window_bounds = array<i64: 256, 1>}, {transform_indices = @transform_2, window_bounds = array<i64: 256, 1>}, {transform_indices = @transform_3, window_bounds = array<i64: 256, 512>}]} {
    %c0 = arith.constant 0 : index
    %c0_0 = arith.constant 0 : index
    %0 = vector.load %arg2[%c0, %c0_0] : memref<256x512xf32, #tpu.memory_space<vmem>>, vector<256x512xf32>
    %c0_1 = arith.constant 0 : index
    %c0_2 = arith.constant 0 : index
    %1 = vector.load %arg3[%c0_1, %c0_2] : memref<256x1xf32, #tpu.memory_space<vmem>>, vector<256x1xf32>
    %2 = vector.broadcast %1 : vector<256x1xf32> to vector<256x512xf32>
    %3 = arith.mulf %0, %2 : vector<256x512xf32>
    %c0_3 = arith.constant 0 : index
    %c0_4 = arith.constant 0 : index
    %4 = vector.load %arg4[%c0_3, %c0_4] : memref<256x1xf32, #tpu.memory_space<vmem>>, vector<256x1xf32>
    %5 = vector.broadcast %4 : vector<256x1xf32> to vector<256x512xf32>
    %6 = arith.cmpf ogt, %3, %5 : vector<256x512xf32>
    %cst = arith.constant 1.000000e+00 : f32
    %cst_5 = arith.constant 0.000000e+00 : f32
    %7 = vector.broadcast %cst : f32 to vector<256x512xf32>
    %8 = vector.broadcast %cst_5 : f32 to vector<256x512xf32>
    %9 = arith.select %6, %7, %8 : vector<256x512xi1>, vector<256x512xf32>
    %c0_6 = arith.constant 0 : index
    %c0_7 = arith.constant 0 : index
    %10 = vector.load %arg5[%c0_6, %c0_7] : memref<256x512xf32, #tpu.memory_space<vmem>>, vector<256x512xf32>
    tpu.vector_store %arg5[%c0_6, %c0_7], %9 {strides = array<i32>} : memref<256x512xf32, #tpu.memory_space<vmem>>, vector<256x512xf32>,
    return
  }
  func.func @transform_0(%arg0: i32, %arg1: i32) -> (i32, i32) {
    %c0_i32 = arith.constant 0 : i32
    return %arg0, %arg1 : i32, i32
  }
  func.func @transform_1(%arg0: i32, %arg1: i32) -> (i32, i32) {
    %c0_i32 = arith.constant 0 : i32
    %c0_i32_0 = arith.constant 0 : i32
    return %arg0, %c0_i32 : i32, i32
  }
  func.func @transform_2(%arg0: i32, %arg1: i32) -> (i32, i32) {
    %c0_i32 = arith.constant 0 : i32
    %c0_i32_0 = arith.constant 0 : i32
    return %arg0, %c0_i32 : i32, i32
  }
  func.func @transform_3(%arg0: i32, %arg1: i32) -> (i32, i32) {
    %c0_i32 = arith.constant 0 : i32
    return %arg0, %arg1 : i32, i32
  }
}

</mosaic_0001>

<llo_original>
// kernel: tpu_custom_call.1
$region0: #{tpu_custom_call.1}
  #allocation0 [shape = 'u32[]', space=smem, size = 0x4, offset = 0x4, fixed_abs, tag = 'smem constant byte address 0x4 - core index']
  #allocation1 [shape = 'u32[72,128]{1,0:T(1,128)}', space=vmem, size = 0x9000, scoped, tag = 'internal scratch']
  %s0 = inlined_call_operand.hbm [shape: f32[512,512], index: 0, kind: input, shape index: {}]
  %s1 = inlined_call_operand.vmem [shape: f32[512,1], index: 1, kind: input, shape index: {}]
  %s2 = inlined_call_operand.vmem [shape: f32[512,1], index: 2, kind: input, shape index: {}]
  %s3 = inlined_call_operand.hbm [shape: f32[512,512], index: 3, kind: output, shape index: {}]
  %s4 = sld [smem:[#allocation0]]
  $region49: #{tpu_custom_call.1} parent=0
    _
  %s6 = ssub.s32 1, %s4
  %s7 = scalar_select 0, %s6, %s4
  $region1: #{tpu_custom_call.1} parent=0
    #allocation2 [shape = 'u8[1048576]{0}', space=vmem, size = 0x100000, scoped, tag = 'input window, operand 0']
    #allocation3 [shape = 's32[2]{0}', space=sflag, size = 0x8, scoped, tag = 'scoped memory for tpu_custom_call.1']
    #allocation4 [shape = 's32[2]{0}', space=sflag, size = 0x8, scoped, tag = 'scoped memory for tpu_custom_call.1']
    #allocation5 [shape = 'u8[1048576]{0}', space=vmem, size = 0x100000, scoped, tag = 'output window, operand 0']
    %8 = vsyncpa [#allocation3], 0
    %s9 = scalar_lea.sflag [#allocation3], 1
    %10 = vsyncpa %s9, 0
    %11 = vsyncpa [#allocation4], 0
    %s12 = scalar_lea.sflag [#allocation4], 1
    %13 = vsyncpa %s12, 0
    loop: start=0, step=1, limit=4
    $region2: #{tpu_custom_call.1} parent=1 // loop_pre_header
      _
    $region3: #{tpu_custom_call.1} parent=1 // loop_header
      %s15 = sphi 0, %s19
      %p16 = scmp.ge.s32.totalorder %s15, 4
      %s22 = sphi 0, %s34
      %s23 = sphi 0, %s30
      %s24 = sphi 0, %s22
      %s25 = sphi 0, %s23
      %s26 = sphi 0, %s24
      %s27 = sphi 0, %s25
      %s39 = sphi 0, %s41
      %s42 = sphi 0, %s39
      %s43 = sphi 0, %s42
      %s59 = sphi 0, %s43
      %s65 = sphi 0, %s67
      %s68 = sphi 0, %s65
      %s69 = sphi 0, %s68
      %s85 = sphi 0, %s69
      %s91 = sphi 0, %s93
      %s94 = sphi 0, %s91
      %s95 = sphi 0, %s94
      %s111 = sphi 0, %s95
      %s119 = sphi 0, %s121
      %s122 = sphi 0, %s119
      %s123 = sphi 0, %s122
      %s139 = sphi 0, %s123
    $region4: #{tpu_custom_call.1} parent=1 // loop_header_branch
      %18 = sbr.rel (%p16) target = $region8
    $region5: #{tpu_custom_call.1} parent=1 // loop_body
      %s20 = ssub.s32 %s15, 1
      %s21 = ssub.s32 %s15, 2
      %s28 = sadd.s32 1, %s23
      %p29 = scmp.ge.s32.totalorder %s28, 1
      %s30 = scalar_select %p29, 0, %s28
      %s31 = sadd.s32 1, %s22
      %s32 = scalar_select %p29, %s31, %s22
      %p33 = scmp.ge.s32.totalorder %s32, 2
      %s34 = scalar_select %p33, 0, %s32
      %s35 = ssub.s32 %s22, %s34
      %s36 = ssub.s32 %s23, %s30
      %s37 = sor.u32 %s35, %s36
      %p38 = scmp.eq.s32.totalorder %s37, 0
      %s40 = sadd.s32 %s39, 1
      %s41 = scalar_select %p38, %s39, %s40
      %p44 = pneg %p38
      %p45 = scmp.eq.s32.totalorder %s15, 1
      %p46 = por %p44, %p45
      %p47 = scmp.ne.s32.totalorder %s39, %s42
      %p48 = scmp.eq.s32.totalorder %s15, 0
      %p49 = por %p47, %p48
      %p50 = scmp.ne.s32.totalorder %s39, %s42
      %p51 = scmp.eq.s32.totalorder %s20, 1
      %p52 = por %p50, %p51
      %p53 = scmp.ne.s32.totalorder %s42, %s43
      %p54 = scmp.eq.s32.totalorder %s20, 0
      %p55 = por %p53, %p54
      %p56 = scmp.ne.s32.totalorder %s42, %s43
      %p57 = scmp.eq.s32.totalorder %s21, 1
      %p58 = por %p56, %p57
      %p60 = scmp.ne.s32.totalorder %s43, %s59
      %p61 = scmp.eq.s32.totalorder %s21, 0
      %p62 = por %p60, %p61
      %s63 = ssub.s32 %s22, %s34
      %p64 = scmp.eq.s32.totalorder %s63, 0
      %s66 = sadd.s32 %s65, 1
      %s67 = scalar_select %p64, %s65, %s66
      %p70 = pneg %p64
      %p71 = scmp.eq.s32.totalorder %s15, 1
      %p72 = por %p70, %p71
      %p73 = scmp.ne.s32.totalorder %s65, %s68
      %p74 = scmp.eq.s32.totalorder %s15, 0
      %p75 = por %p73, %p74
      %p76 = scmp.ne.s32.totalorder %s65, %s68
      %p77 = scmp.eq.s32.totalorder %s20, 1
      %p78 = por %p76, %p77
      %p79 = scmp.ne.s32.totalorder %s68, %s69
      %p80 = scmp.eq.s32.totalorder %s20, 0
      %p81 = por %p79, %p80
      %p82 = scmp.ne.s32.totalorder %s68, %s69
      %p83 = scmp.eq.s32.totalorder %s21, 1
      %p84 = por %p82, %p83
      %p86 = scmp.ne.s32.totalorder %s69, %s85
      %p87 = scmp.eq.s32.totalorder %s21, 0
      %p88 = por %p86, %p87
      %s89 = ssub.s32 %s22, %s34
      %p90 = scmp.eq.s32.totalorder %s89, 0
      %s92 = sadd.s32 %s91, 1
      %s93 = scalar_select %p90, %s91, %s92
      %p96 = pneg %p90
      %p97 = scmp.eq.s32.totalorder %s15, 1
      %p98 = por %p96, %p97
      %p99 = scmp.ne.s32.totalorder %s91, %s94
      %p100 = scmp.eq.s32.totalorder %s15, 0
      %p101 = por %p99, %p100
      %p102 = scmp.ne.s32.totalorder %s91, %s94
      %p103 = scmp.eq.s32.totalorder %s20, 1
      %p104 = por %p102, %p103
      %p105 = scmp.ne.s32.totalorder %s94, %s95
      %p106 = scmp.eq.s32.totalorder %s20, 0
      %p107 = por %p105, %p106
      %p108 = scmp.ne.s32.totalorder %s94, %s95
      %p109 = scmp.eq.s32.totalorder %s21, 1
      %p110 = por %p108, %p109
      %p112 = scmp.ne.s32.totalorder %s95, %s111
      %p113 = scmp.eq.s32.totalorder %s21, 0
      %p114 = por %p112, %p113
      %s115 = ssub.s32 %s22, %s34
      %s116 = ssub.s32 %s23, %s30
      %s117 = sor.u32 %s115, %s116
      %p118 = scmp.eq.s32.totalorder %s117, 0
      %s120 = sadd.s32 %s119, 1
      %s121 = scalar_select %p118, %s119, %s120
      %p124 = pneg %p118
      %p125 = scmp.eq.s32.totalorder %s15, 1
      %p126 = por %p124, %p125
      %p127 = scmp.ne.s32.totalorder %s119, %s122
      %p128 = scmp.eq.s32.totalorder %s15, 0
      %p129 = por %p127, %p128
      %p130 = scmp.ne.s32.totalorder %s119, %s122
      %p131 = scmp.eq.s32.totalorder %s20, 1
      %p132 = por %p130, %p131
      %p133 = scmp.ne.s32.totalorder %s122, %s123
      %p134 = scmp.eq.s32.totalorder %s20, 0
      %p135 = por %p133, %p134
      %p136 = scmp.ne.s32.totalorder %s122, %s123
      %p137 = scmp.eq.s32.totalorder %s21, 1
      %p138 = por %p136, %p137
      %p140 = scmp.ne.s32.totalorder %s123, %s139
      %p141 = scmp.eq.s32.totalorder %s21, 0
      %p142 = por %p140, %p141
      %p143 = scmp.le.s32.totalorder 1, %s15
      %p144 = scmp.lt.s32.totalorder %s15, 3
      %p145 = pnand %p143, %p144
      %p146 = pneg %p145
      // Predicated region
      $region9: #{tpu_custom_call.1} parent=5 // pred_check
        _
      $region10: #{tpu_custom_call.1} parent=5 // pred_check_branch
        %148 = sbr.rel (%p145) target = $region12
      $region11: #{tpu_custom_call.1} parent=5 // pred_region
        %s149 = ssub.s32 %s15, 1
      $region12: #{tpu_custom_call.1} parent=5 // pred_fallthru
        _
      %p150 = scmp.lt.s32.totalorder %s15, 2
      // Predicated region
      $region13: #{tpu_custom_call.1} parent=5 // pred_check
        %p151 = pneg %p150
      $region14: #{tpu_custom_call.1} parent=5 // pred_check_branch
        %153 = sbr.rel (%p151) target = $region16
      $region15: #{tpu_custom_call.1} parent=5 // pred_region
        // Predicated region
        $region17: #{tpu_custom_call.1} parent=15 // pred_check
          %p154 = pneg %p49
        $region18: #{tpu_custom_call.1} parent=15 // pred_check_branch
          %156 = sbr.rel (%p154) target = $region20
        $region19: #{tpu_custom_call.1} parent=15 // pred_region
          %s157 = sand.u32 %s39, 1
          %s158 = scalar_lea.sflag [#allocation3], %s157
          %s159 = sand.u32 %s39, 1
          %s160 = smul.addr %s159, 1024
          %s161 = scalar_lea.vmem [#allocation2], %s160
          %s162 = smul.u32 32, %s22
          %s163 = smul.u32 4, %s23
          %165 = vsyncadd %s158, 0
          %s166 = smul.addr %s162, 4
          %s167 = sadd.s32 %s163, %s166
          %s168 = smul.addr %s167, 8
          %s169 = scalar_lea.hbm %s0, %s168
          %s170 = sshll.u32 %s169, 4
          %s171 = int_to_ptr.hbm [resolvable:$true] %s170
          %s172 = sshll.u32 %s161, 4
          %s173 = int_to_ptr.vmem [resolvable:$true] %s172
          %178 = dma.hbm_to_vmem [thread:$0]  %s171, 16384, %s173, %s158, 512, 512, 32
        $region20: #{tpu_custom_call.1} parent=15 // pred_fallthru
          _
        // Predicated region
        $region21: #{tpu_custom_call.1} parent=15 // pred_check
          %p179 = pneg %p75
        $region22: #{tpu_custom_call.1} parent=15 // pred_check_branch
          %181 = sbr.rel (%p179) target = $region24
        $region23: #{tpu_custom_call.1} parent=15 // pred_region
          %s182 = smul.u32 32, %s22
          %p183 = scmp.lt.s32.totalorder %s182, 63
          %s184 = scalar_select %p183, %s182, 63
          %s185 = smul.addr %s184, 8
          %s186 = scalar_lea.vmem %s1, %s185
          %s187 = smul.u32 32, %s22
        $region24: #{tpu_custom_call.1} parent=15 // pred_fallthru
          _
        // Predicated region
        $region25: #{tpu_custom_call.1} parent=15 // pred_check
          %p188 = pneg %p101
        $region26: #{tpu_custom_call.1} parent=15 // pred_check_branch
          %190 = sbr.rel (%p188) target = $region28
        $region27: #{tpu_custom_call.1} parent=15 // pred_region
          %s191 = smul.u32 32, %s22
          %p192 = scmp.lt.s32.totalorder %s191, 63
          %s193 = scalar_select %p192, %s191, 63
          %s194 = smul.addr %s193, 8
          %s195 = scalar_lea.vmem %s2, %s194
          %s196 = smul.u32 32, %s22
        $region28: #{tpu_custom_call.1} parent=15 // pred_fallthru
          _
      $region16: #{tpu_custom_call.1} parent=5 // pred_fallthru
        _
      %p197 = scmp.le.s32.totalorder 1, %s15
      %p198 = scmp.lt.s32.totalorder %s15, 3
      %p199 = pnand %p197, %p198
      %p200 = pneg %p199
      // Predicated region
      $region29: #{tpu_custom_call.1} parent=5 // pred_check
        _
      $region30: #{tpu_custom_call.1} parent=5 // pred_check_branch
        %202 = sbr.rel (%p199) target = $region32
      $region31: #{tpu_custom_call.1} parent=5 // pred_region
        %s203 = ssub.s32 %s15, 1
        %s204 = sand.u32 %s42, 1
        %s205 = scalar_lea.sflag [#allocation3], %s204
        %s206 = sand.u32 %s42, 1
        %s207 = smul.addr %s206, 1024
        %s208 = scalar_lea.vmem [#allocation2], %s207
        // Predicated region
        $region33: #{tpu_custom_call.1} parent=31 // pred_check
          %p209 = pneg %p55
        $region34: #{tpu_custom_call.1} parent=31 // pred_check_branch
          %211 = sbr.rel (%p209) target = $region36
        $region35: #{tpu_custom_call.1} parent=31 // pred_region
          %213 = dma.done %s205, 16384
        $region36: #{tpu_custom_call.1} parent=31 // pred_fallthru
          _
        %s214 = sand.u32 %s42, 1
        %s215 = scalar_lea.sflag [#allocation3], %s214
        %s216 = sand.u32 %s42, 1
        %s217 = smul.addr %s216, 1024
        %s218 = scalar_lea.vmem [#allocation2], %s217
        %p219 = pneg %p55
        %p220 = pneg %p52
        %s221 = smul.u32 32, %s24
        %p222 = scmp.lt.s32.totalorder %s221, 63
        %s223 = scalar_select %p222, %s221, 63
        %s224 = smul.addr %s223, 8
        %s225 = scalar_lea.vmem %s1, %s224
        %p226 = pneg %p81
        %p227 = pneg %p78
        %s228 = smul.u32 32, %s24
        %p229 = scmp.lt.s32.totalorder %s228, 63
        %s230 = scalar_select %p229, %s228, 63
        %s231 = smul.addr %s230, 8
        %s232 = scalar_lea.vmem %s2, %s231
        %p233 = pneg %p107
        %p234 = pneg %p104
        %p235 = pneg %p135
        %p236 = pneg %p132
        %s237 = sand.u32 %s122, 1
        %s238 = scalar_lea.sflag [#allocation4], %s237
        %s239 = sand.u32 %s122, 1
        %s240 = smul.addr %s239, 1024
        %s241 = scalar_lea.vmem [#allocation5], %s240
        %s242 = smul.u32 32, %s24
        %s243 = smul.u32 4, %s25
        %s244 = smul.u32 32, %s24
        %p245 = scmp.lt.s32.totalorder %s244, 63
        %s246 = scalar_select %p245, %s244, 63
        %s247 = smul.addr %s246, 8
        %s248 = scalar_lea.vmem %s1, %s247
        %s249 = smul.u32 32, %s24
        %s250 = smul.u32 32, %s24
        %p251 = scmp.lt.s32.totalorder %s250, 63
        %s252 = scalar_select %p251, %s250, 63
        %s253 = smul.addr %s252, 8
        %s254 = scalar_lea.vmem %s2, %s253
        %s255 = smul.u32 32, %s24
        %s256 = smul.u32 32, %s24
        %s257 = smul.u32 4, %s25
        %v258 = vld [vmem:[%s208] sm:$0xff]
        %v259 = vld [vmem:[%s208 + $0x8] sm:$0xff]
        %v260 = vld [vmem:[%s208 + $0x10] sm:$0xff]
        %v261 = vld [vmem:[%s208 + $0x18] sm:$0xff]
        %v262 = vld [vmem:[%s208 + $0x20] sm:$0xff]
        %v263 = vld [vmem:[%s208 + $0x28] sm:$0xff]
        %v264 = vld [vmem:[%s208 + $0x30] sm:$0xff]
        %v265 = vld [vmem:[%s208 + $0x38] sm:$0xff]
        %v266 = vld [vmem:[%s208 + $0x40] sm:$0xff]
        %v267 = vld [vmem:[%s208 + $0x48] sm:$0xff]
        %v268 = vld [vmem:[%s208 + $0x50] sm:$0xff]
        %v269 = vld [vmem:[%s208 + $0x58] sm:$0xff]
        %v270 = vld [vmem:[%s208 + $0x60] sm:$0xff]
        %v271 = vld [vmem:[%s208 + $0x68] sm:$0xff]
        %v272 = vld [vmem:[%s208 + $0x70] sm:$0xff]
        %v273 = vld [vmem:[%s208 + $0x78] sm:$0xff]
        %v274 = vld [vmem:[%s208 + $0x80] sm:$0xff]
        %v275 = vld [vmem:[%s208 + $0x88] sm:$0xff]
        %v276 = vld [vmem:[%s208 + $0x90] sm:$0xff]
        %v277 = vld [vmem:[%s208 + $0x98] sm:$0xff]
        %v278 = vld [vmem:[%s208 + $0xa0] sm:$0xff]
        %v279 = vld [vmem:[%s208 + $0xa8] sm:$0xff]
        %v280 = vld [vmem:[%s208 + $0xb0] sm:$0xff]
        %v281 = vld [vmem:[%s208 + $0xb8] sm:$0xff]
        %v282 = vld [vmem:[%s208 + $0xc0] sm:$0xff]
        %v283 = vld [vmem:[%s208 + $0xc8] sm:$0xff]
        %v284 = vld [vmem:[%s208 + $0xd0] sm:$0xff]
        %v285 = vld [vmem:[%s208 + $0xd8] sm:$0xff]
        %v286 = vld [vmem:[%s208 + $0xe0] sm:$0xff]
        %v287 = vld [vmem:[%s208 + $0xe8] sm:$0xff]
        %v288 = vld [vmem:[%s208 + $0xf0] sm:$0xff]
        %v289 = vld [vmem:[%s208 + $0xf8] sm:$0xff]
        %v290 = vld [vmem:[%s208 + $0x100] sm:$0xff]
        %v291 = vld [vmem:[%s208 + $0x108] sm:$0xff]
        %v292 = vld [vmem:[%s208 + $0x110] sm:$0xff]
        %v293 = vld [vmem:[%s208 + $0x118] sm:$0xff]
        %v294 = vld [vmem:[%s208 + $0x120] sm:$0xff]
        %v295 = vld [vmem:[%s208 + $0x128] sm:$0xff]
        %v296 = vld [vmem:[%s208 + $0x130] sm:$0xff]
        %v297 = vld [vmem:[%s208 + $0x138] sm:$0xff]
        %v298 = vld [vmem:[%s208 + $0x140] sm:$0xff]
        %v299 = vld [vmem:[%s208 + $0x148] sm:$0xff]
        %v300 = vld [vmem:[%s208 + $0x150] sm:$0xff]
        %v301 = vld [vmem:[%s208 + $0x158] sm:$0xff]
        %v302 = vld [vmem:[%s208 + $0x160] sm:$0xff]
        %v303 = vld [vmem:[%s208 + $0x168] sm:$0xff]
        %v304 = vld [vmem:[%s208 + $0x170] sm:$0xff]
        %v305 = vld [vmem:[%s208 + $0x178] sm:$0xff]
        %v306 = vld [vmem:[%s208 + $0x180] sm:$0xff]
        %v307 = vld [vmem:[%s208 + $0x188] sm:$0xff]
        %v308 = vld [vmem:[%s208 + $0x190] sm:$0xff]
        %v309 = vld [vmem:[%s208 + $0x198] sm:$0xff]
        %v310 = vld [vmem:[%s208 + $0x1a0] sm:$0xff]
        %v311 = vld [vmem:[%s208 + $0x1a8] sm:$0xff]
        %v312 = vld [vmem:[%s208 + $0x1b0] sm:$0xff]
        %v313 = vld [vmem:[%s208 + $0x1b8] sm:$0xff]
        %v314 = vld [vmem:[%s208 + $0x1c0] sm:$0xff]
        %v315 = vld [vmem:[%s208 + $0x1c8] sm:$0xff]
        %v316 = vld [vmem:[%s208 + $0x1d0] sm:$0xff]
        %v317 = vld [vmem:[%s208 + $0x1d8] sm:$0xff]
        %v318 = vld [vmem:[%s208 + $0x1e0] sm:$0xff]
        %v319 = vld [vmem:[%s208 + $0x1e8] sm:$0xff]
        %v320 = vld [vmem:[%s208 + $0x1f0] sm:$0xff]
        %v321 = vld [vmem:[%s208 + $0x1f8] sm:$0xff]
        %v322 = vld [vmem:[%s208 + $0x200] sm:$0xff]
        %v323 = vld [vmem:[%s208 + $0x208] sm:$0xff]
        %v324 = vld [vmem:[%s208 + $0x210] sm:$0xff]
        %v325 = vld [vmem:[%s208 + $0x218] sm:$0xff]
        %v326 = vld [vmem:[%s208 + $0x220] sm:$0xff]
        %v327 = vld [vmem:[%s208 + $0x228] sm:$0xff]
        %v328 = vld [vmem:[%s208 + $0x230] sm:$0xff]
        %v329 = vld [vmem:[%s208 + $0x238] sm:$0xff]
        %v330 = vld [vmem:[%s208 + $0x240] sm:$0xff]
        %v331 = vld [vmem:[%s208 + $0x248] sm:$0xff]
        %v332 = vld [vmem:[%s208 + $0x250] sm:$0xff]
        %v333 = vld [vmem:[%s208 + $0x258] sm:$0xff]
        %v334 = vld [vmem:[%s208 + $0x260] sm:$0xff]
        %v335 = vld [vmem:[%s208 + $0x268] sm:$0xff]
        %v336 = vld [vmem:[%s208 + $0x270] sm:$0xff]
        %v337 = vld [vmem:[%s208 + $0x278] sm:$0xff]
        %v338 = vld [vmem:[%s208 + $0x280] sm:$0xff]
        %v339 = vld [vmem:[%s208 + $0x288] sm:$0xff]
        %v340 = vld [vmem:[%s208 + $0x290] sm:$0xff]
        %v341 = vld [vmem:[%s208 + $0x298] sm:$0xff]
        %v342 = vld [vmem:[%s208 + $0x2a0] sm:$0xff]
        %v343 = vld [vmem:[%s208 + $0x2a8] sm:$0xff]
        %v344 = vld [vmem:[%s208 + $0x2b0] sm:$0xff]
        %v345 = vld [vmem:[%s208 + $0x2b8] sm:$0xff]
        %v346 = vld [vmem:[%s208 + $0x2c0] sm:$0xff]
        %v347 = vld [vmem:[%s208 + $0x2c8] sm:$0xff]
        %v348 = vld [vmem:[%s208 + $0x2d0] sm:$0xff]
        %v349 = vld [vmem:[%s208 + $0x2d8] sm:$0xff]
        %v350 = vld [vmem:[%s208 + $0x2e0] sm:$0xff]
        %v351 = vld [vmem:[%s208 + $0x2e8] sm:$0xff]
        %v352 = vld [vmem:[%s208 + $0x2f0] sm:$0xff]
        %v353 = vld [vmem:[%s208 + $0x2f8] sm:$0xff]
        %v354 = vld [vmem:[%s208 + $0x300] sm:$0xff]
        %v355 = vld [vmem:[%s208 + $0x308] sm:$0xff]
        %v356 = vld [vmem:[%s208 + $0x310] sm:$0xff]
        %v357 = vld [vmem:[%s208 + $0x318] sm:$0xff]
        %v358 = vld [vmem:[%s208 + $0x320] sm:$0xff]
        %v359 = vld [vmem:[%s208 + $0x328] sm:$0xff]
        %v360 = vld [vmem:[%s208 + $0x330] sm:$0xff]
        %v361 = vld [vmem:[%s208 + $0x338] sm:$0xff]
        %v362 = vld [vmem:[%s208 + $0x340] sm:$0xff]
        %v363 = vld [vmem:[%s208 + $0x348] sm:$0xff]
        %v364 = vld [vmem:[%s208 + $0x350] sm:$0xff]
        %v365 = vld [vmem:[%s208 + $0x358] sm:$0xff]
        %v366 = vld [vmem:[%s208 + $0x360] sm:$0xff]
        %v367 = vld [vmem:[%s208 + $0x368] sm:$0xff]
        %v368 = vld [vmem:[%s208 + $0x370] sm:$0xff]
        %v369 = vld [vmem:[%s208 + $0x378] sm:$0xff]
        %v370 = vld [vmem:[%s208 + $0x380] sm:$0xff]
        %v371 = vld [vmem:[%s208 + $0x388] sm:$0xff]
        %v372 = vld [vmem:[%s208 + $0x390] sm:$0xff]
        %v373 = vld [vmem:[%s208 + $0x398] sm:$0xff]
        %v374 = vld [vmem:[%s208 + $0x3a0] sm:$0xff]
        %v375 = vld [vmem:[%s208 + $0x3a8] sm:$0xff]
        %v376 = vld [vmem:[%s208 + $0x3b0] sm:$0xff]
        %v377 = vld [vmem:[%s208 + $0x3b8] sm:$0xff]
        %v378 = vld [vmem:[%s208 + $0x3c0] sm:$0xff]
        %v379 = vld [vmem:[%s208 + $0x3c8] sm:$0xff]
        %v380 = vld [vmem:[%s208 + $0x3d0] sm:$0xff]
        %v381 = vld [vmem:[%s208 + $0x3d8] sm:$0xff]
        %v382 = vld [vmem:[%s208 + $0x3e0] sm:$0xff]
        %v383 = vld [vmem:[%s208 + $0x3e8] sm:$0xff]
        %v384 = vld [vmem:[%s208 + $0x3f0] sm:$0xff]
        %v385 = vld [vmem:[%s208 + $0x3f8] sm:$0xff]
        %v386 = vld [vmem:[%s248] sm:$0xff]
        %v387 = vld [vmem:[%s248 + $0x8] sm:$0xff]
        %v388 = vld [vmem:[%s248 + $0x10] sm:$0xff]
        %v389 = vld [vmem:[%s248 + $0x18] sm:$0xff]
        %v390 = vld [vmem:[%s248 + $0x20] sm:$0xff]
        %v391 = vld [vmem:[%s248 + $0x28] sm:$0xff]
        %v392 = vld [vmem:[%s248 + $0x30] sm:$0xff]
        %v393 = vld [vmem:[%s248 + $0x38] sm:$0xff]
        %v394 = vld [vmem:[%s248 + $0x40] sm:$0xff]
        %v395 = vld [vmem:[%s248 + $0x48] sm:$0xff]
        %v396 = vld [vmem:[%s248 + $0x50] sm:$0xff]
        %v397 = vld [vmem:[%s248 + $0x58] sm:$0xff]
        %v398 = vld [vmem:[%s248 + $0x60] sm:$0xff]
        %v399 = vld [vmem:[%s248 + $0x68] sm:$0xff]
        %v400 = vld [vmem:[%s248 + $0x70] sm:$0xff]
        %v401 = vld [vmem:[%s248 + $0x78] sm:$0xff]
        %v402 = vld [vmem:[%s248 + $0x80] sm:$0xff]
        %v403 = vld [vmem:[%s248 + $0x88] sm:$0xff]
        %v404 = vld [vmem:[%s248 + $0x90] sm:$0xff]
        %v405 = vld [vmem:[%s248 + $0x98] sm:$0xff]
        %v406 = vld [vmem:[%s248 + $0xa0] sm:$0xff]
        %v407 = vld [vmem:[%s248 + $0xa8] sm:$0xff]
        %v408 = vld [vmem:[%s248 + $0xb0] sm:$0xff]
        %v409 = vld [vmem:[%s248 + $0xb8] sm:$0xff]
        %v410 = vld [vmem:[%s248 + $0xc0] sm:$0xff]
        %v411 = vld [vmem:[%s248 + $0xc8] sm:$0xff]
        %v412 = vld [vmem:[%s248 + $0xd0] sm:$0xff]
        %v413 = vld [vmem:[%s248 + $0xd8] sm:$0xff]
        %v414 = vld [vmem:[%s248 + $0xe0] sm:$0xff]
        %v415 = vld [vmem:[%s248 + $0xe8] sm:$0xff]
        %v416 = vld [vmem:[%s248 + $0xf0] sm:$0xff]
        %v417 = vld [vmem:[%s248 + $0xf8] sm:$0xff]
        %419 = vset.pattern.permute.xlu0 0
        %420 = vperm.xlu0 %419, %v386
        %v421 = vpop.permute.xlu0 %420
        %424 = vset.pattern.permute.xlu0 0
        %425 = vperm.xlu0 %424, %v387
        %v426 = vpop.permute.xlu0 %425
        %429 = vset.pattern.permute.xlu0 0
        %430 = vperm.xlu0 %429, %v388
        %v431 = vpop.permute.xlu0 %430
        %434 = vset.pattern.permute.xlu0 0
        %435 = vperm.xlu0 %434, %v389
        %v436 = vpop.permute.xlu0 %435
        %439 = vset.pattern.permute.xlu0 0
        %440 = vperm.xlu0 %439, %v390
        %v441 = vpop.permute.xlu0 %440
        %444 = vset.pattern.permute.xlu0 0
        %445 = vperm.xlu0 %444, %v391
        %v446 = vpop.permute.xlu0 %445
        %449 = vset.pattern.permute.xlu0 0
        %450 = vperm.xlu0 %449, %v392
        %v451 = vpop.permute.xlu0 %450
        %454 = vset.pattern.permute.xlu0 0
        %455 = vperm.xlu0 %454, %v393
        %v456 = vpop.permute.xlu0 %455
        %459 = vset.pattern.permute.xlu0 0
        %460 = vperm.xlu0 %459, %v394
        %v461 = vpop.permute.xlu0 %460
        %464 = vset.pattern.permute.xlu0 0
        %465 = vperm.xlu0 %464, %v395
        %v466 = vpop.permute.xlu0 %465
        %469 = vset.pattern.permute.xlu0 0
        %470 = vperm.xlu0 %469, %v396
        %v471 = vpop.permute.xlu0 %470
        %474 = vset.pattern.permute.xlu0 0
        %475 = vperm.xlu0 %474, %v397
        %v476 = vpop.permute.xlu0 %475
        %479 = vset.pattern.permute.xlu0 0
        %480 = vperm.xlu0 %479, %v398
        %v481 = vpop.permute.xlu0 %480
        %484 = vset.pattern.permute.xlu0 0
        %485 = vperm.xlu0 %484, %v399
        %v486 = vpop.permute.xlu0 %485
        %489 = vset.pattern.permute.xlu0 0
        %490 = vperm.xlu0 %489, %v400
        %v491 = vpop.permute.xlu0 %490
        %494 = vset.pattern.permute.xlu0 0
        %495 = vperm.xlu0 %494, %v401
        %v496 = vpop.permute.xlu0 %495
        %499 = vset.pattern.permute.xlu0 0
        %500 = vperm.xlu0 %499, %v402
        %v501 = vpop.permute.xlu0 %500
        %504 = vset.pattern.permute.xlu0 0
        %505 = vperm.xlu0 %504, %v403
        %v506 = vpop.permute.xlu0 %505
        %509 = vset.pattern.permute.xlu0 0
        %510 = vperm.xlu0 %509, %v404
        %v511 = vpop.permute.xlu0 %510
        %514 = vset.pattern.permute.xlu0 0
        %515 = vperm.xlu0 %514, %v405
        %v516 = vpop.permute.xlu0 %515
        %519 = vset.pattern.permute.xlu0 0
        %520 = vperm.xlu0 %519, %v406
        %v521 = vpop.permute.xlu0 %520
        %524 = vset.pattern.permute.xlu0 0
        %525 = vperm.xlu0 %524, %v407
        %v526 = vpop.permute.xlu0 %525
        %529 = vset.pattern.permute.xlu0 0
        %530 = vperm.xlu0 %529, %v408
        %v531 = vpop.permute.xlu0 %530
        %534 = vset.pattern.permute.xlu0 0
        %535 = vperm.xlu0 %534, %v409
        %v536 = vpop.permute.xlu0 %535
        %539 = vset.pattern.permute.xlu0 0
        %540 = vperm.xlu0 %539, %v410
        %v541 = vpop.permute.xlu0 %540
        %544 = vset.pattern.permute.xlu0 0
        %545 = vperm.xlu0 %544, %v411
        %v546 = vpop.permute.xlu0 %545
        %549 = vset.pattern.permute.xlu0 0
        %550 = vperm.xlu0 %549, %v412
        %v551 = vpop.permute.xlu0 %550
        %554 = vset.pattern.permute.xlu0 0
        %555 = vperm.xlu0 %554, %v413
        %v556 = vpop.permute.xlu0 %555
        %559 = vset.pattern.permute.xlu0 0
        %560 = vperm.xlu0 %559, %v414
        %v561 = vpop.permute.xlu0 %560
        %564 = vset.pattern.permute.xlu0 0
        %565 = vperm.xlu0 %564, %v415
        %v566 = vpop.permute.xlu0 %565
        %569 = vset.pattern.permute.xlu0 0
        %570 = vperm.xlu0 %569, %v416
        %v571 = vpop.permute.xlu0 %570
        %574 = vset.pattern.permute.xlu0 0
        %575 = vperm.xlu0 %574, %v417
        %v576 = vpop.permute.xlu0 %575
        %v578 = vmul.f32 %v258, %v421
        %v579 = vmul.f32 %v259, %v421
        %v580 = vmul.f32 %v260, %v421
        %v581 = vmul.f32 %v261, %v421
        %v582 = vmul.f32 %v262, %v426
        %v583 = vmul.f32 %v263, %v426
        %v584 = vmul.f32 %v264, %v426
        %v585 = vmul.f32 %v265, %v426
        %v586 = vmul.f32 %v266, %v431
        %v587 = vmul.f32 %v267, %v431
        %v588 = vmul.f32 %v268, %v431
        %v589 = vmul.f32 %v269, %v431
        %v590 = vmul.f32 %v270, %v436
        %v591 = vmul.f32 %v271, %v436
        %v592 = vmul.f32 %v272, %v436
        %v593 = vmul.f32 %v273, %v436
        %v594 = vmul.f32 %v274, %v441
        %v595 = vmul.f32 %v275, %v441
        %v596 = vmul.f32 %v276, %v441
        %v597 = vmul.f32 %v277, %v441
        %v598 = vmul.f32 %v278, %v446
        %v599 = vmul.f32 %v279, %v446
        %v600 = vmul.f32 %v280, %v446
        %v601 = vmul.f32 %v281, %v446
        %v602 = vmul.f32 %v282, %v451
        %v603 = vmul.f32 %v283, %v451
        %v604 = vmul.f32 %v284, %v451
        %v605 = vmul.f32 %v285, %v451
        %v606 = vmul.f32 %v286, %v456
        %v607 = vmul.f32 %v287, %v456
        %v608 = vmul.f32 %v288, %v456
        %v609 = vmul.f32 %v289, %v456
        %v610 = vmul.f32 %v290, %v461
        %v611 = vmul.f32 %v291, %v461
        %v612 = vmul.f32 %v292, %v461
        %v613 = vmul.f32 %v293, %v461
        %v614 = vmul.f32 %v294, %v466
        %v615 = vmul.f32 %v295, %v466
        %v616 = vmul.f32 %v296, %v466
        %v617 = vmul.f32 %v297, %v466
        %v618 = vmul.f32 %v298, %v471
        %v619 = vmul.f32 %v299, %v471
        %v620 = vmul.f32 %v300, %v471
        %v621 = vmul.f32 %v301, %v471
        %v622 = vmul.f32 %v302, %v476
        %v623 = vmul.f32 %v303, %v476
        %v624 = vmul.f32 %v304, %v476
        %v625 = vmul.f32 %v305, %v476
        %v626 = vmul.f32 %v306, %v481
        %v627 = vmul.f32 %v307, %v481
        %v628 = vmul.f32 %v308, %v481
        %v629 = vmul.f32 %v309, %v481
        %v630 = vmul.f32 %v310, %v486
        %v631 = vmul.f32 %v311, %v486
        %v632 = vmul.f32 %v312, %v486
        %v633 = vmul.f32 %v313, %v486
        %v634 = vmul.f32 %v314, %v491
        %v635 = vmul.f32 %v315, %v491
        %v636 = vmul.f32 %v316, %v491
        %v637 = vmul.f32 %v317, %v491
        %v638 = vmul.f32 %v318, %v496
        %v639 = vmul.f32 %v319, %v496
        %v640 = vmul.f32 %v320, %v496
        %v641 = vmul.f32 %v321, %v496
        %v642 = vmul.f32 %v322, %v501
        %v643 = vmul.f32 %v323, %v501
        %v644 = vmul.f32 %v324, %v501
        %v645 = vmul.f32 %v325, %v501
        %v646 = vmul.f32 %v326, %v506
        %v647 = vmul.f32 %v327, %v506
        %v648 = vmul.f32 %v328, %v506
        %v649 = vmul.f32 %v329, %v506
        %v650 = vmul.f32 %v330, %v511
        %v651 = vmul.f32 %v331, %v511
        %v652 = vmul.f32 %v332, %v511
        %v653 = vmul.f32 %v333, %v511
        %v654 = vmul.f32 %v334, %v516
        %v655 = vmul.f32 %v335, %v516
        %v656 = vmul.f32 %v336, %v516
        %v657 = vmul.f32 %v337, %v516
        %v658 = vmul.f32 %v338, %v521
        %v659 = vmul.f32 %v339, %v521
        %v660 = vmul.f32 %v340, %v521
        %v661 = vmul.f32 %v341, %v521
        %v662 = vmul.f32 %v342, %v526
        %v663 = vmul.f32 %v343, %v526
        %v664 = vmul.f32 %v344, %v526
        %v665 = vmul.f32 %v345, %v526
        %v666 = vmul.f32 %v346, %v531
        %v667 = vmul.f32 %v347, %v531
        %v668 = vmul.f32 %v348, %v531
        %v669 = vmul.f32 %v349, %v531
        %v670 = vmul.f32 %v350, %v536
        %v671 = vmul.f32 %v351, %v536
        %v672 = vmul.f32 %v352, %v536
        %v673 = vmul.f32 %v353, %v536
        %v674 = vmul.f32 %v354, %v541
        %v675 = vmul.f32 %v355, %v541
        %v676 = vmul.f32 %v356, %v541
        %v677 = vmul.f32 %v357, %v541
        %v678 = vmul.f32 %v358, %v546
        %v679 = vmul.f32 %v359, %v546
        %v680 = vmul.f32 %v360, %v546
        %v681 = vmul.f32 %v361, %v546
        %v682 = vmul.f32 %v362, %v551
        %v683 = vmul.f32 %v363, %v551
        %v684 = vmul.f32 %v364, %v551
        %v685 = vmul.f32 %v365, %v551
        %v686 = vmul.f32 %v366, %v556
        %v687 = vmul.f32 %v367, %v556
        %v688 = vmul.f32 %v368, %v556
        %v689 = vmul.f32 %v369, %v556
        %v690 = vmul.f32 %v370, %v561
        %v691 = vmul.f32 %v371, %v561
        %v692 = vmul.f32 %v372, %v561
        %v693 = vmul.f32 %v373, %v561
        %v694 = vmul.f32 %v374, %v566
        %v695 = vmul.f32 %v375, %v566
        %v696 = vmul.f32 %v376, %v566
        %v697 = vmul.f32 %v377, %v566
        %v698 = vmul.f32 %v378, %v571
        %v699 = vmul.f32 %v379, %v571
        %v700 = vmul.f32 %v380, %v571
        %v701 = vmul.f32 %v381, %v571
        %v702 = vmul.f32 %v382, %v576
        %v703 = vmul.f32 %v383, %v576
        %v704 = vmul.f32 %v384, %v576
        %v705 = vmul.f32 %v385, %v576
        %v706 = vld [vmem:[%s254] sm:$0xff]
        %v707 = vld [vmem:[%s254 + $0x8] sm:$0xff]
        %v708 = vld [vmem:[%s254 + $0x10] sm:$0xff]
        %v709 = vld [vmem:[%s254 + $0x18] sm:$0xff]
        %v710 = vld [vmem:[%s254 + $0x20] sm:$0xff]
        %v711 = vld [vmem:[%s254 + $0x28] sm:$0xff]
        %v712 = vld [vmem:[%s254 + $0x30] sm:$0xff]
        %v713 = vld [vmem:[%s254 + $0x38] sm:$0xff]
        %v714 = vld [vmem:[%s254 + $0x40] sm:$0xff]
        %v715 = vld [vmem:[%s254 + $0x48] sm:$0xff]
        %v716 = vld [vmem:[%s254 + $0x50] sm:$0xff]
        %v717 = vld [vmem:[%s254 + $0x58] sm:$0xff]
        %v718 = vld [vmem:[%s254 + $0x60] sm:$0xff]
        %v719 = vld [vmem:[%s254 + $0x68] sm:$0xff]
        %v720 = vld [vmem:[%s254 + $0x70] sm:$0xff]
        %v721 = vld [vmem:[%s254 + $0x78] sm:$0xff]
        %v722 = vld [vmem:[%s254 + $0x80] sm:$0xff]
        %v723 = vld [vmem:[%s254 + $0x88] sm:$0xff]
        %v724 = vld [vmem:[%s254 + $0x90] sm:$0xff]
        %v725 = vld [vmem:[%s254 + $0x98] sm:$0xff]
        %v726 = vld [vmem:[%s254 + $0xa0] sm:$0xff]
        %v727 = vld [vmem:[%s254 + $0xa8] sm:$0xff]
        %v728 = vld [vmem:[%s254 + $0xb0] sm:$0xff]
        %v729 = vld [vmem:[%s254 + $0xb8] sm:$0xff]
        %v730 = vld [vmem:[%s254 + $0xc0] sm:$0xff]
        %v731 = vld [vmem:[%s254 + $0xc8] sm:$0xff]
        %v732 = vld [vmem:[%s254 + $0xd0] sm:$0xff]
        %v733 = vld [vmem:[%s254 + $0xd8] sm:$0xff]
        %v734 = vld [vmem:[%s254 + $0xe0] sm:$0xff]
        %v735 = vld [vmem:[%s254 + $0xe8] sm:$0xff]
        %v736 = vld [vmem:[%s254 + $0xf0] sm:$0xff]
        %v737 = vld [vmem:[%s254 + $0xf8] sm:$0xff]
        %739 = vset.pattern.permute.xlu0 0
        %740 = vperm.xlu0 %739, %v706
        %v741 = vpop.permute.xlu0 %740
        %744 = vset.pattern.permute.xlu0 0
        %745 = vperm.xlu0 %744, %v707
        %v746 = vpop.permute.xlu0 %745
        %749 = vset.pattern.permute.xlu0 0
        %750 = vperm.xlu0 %749, %v708
        %v751 = vpop.permute.xlu0 %750
        %754 = vset.pattern.permute.xlu0 0
        %755 = vperm.xlu0 %754, %v709
        %v756 = vpop.permute.xlu0 %755
        %759 = vset.pattern.permute.xlu0 0
        %760 = vperm.xlu0 %759, %v710
        %v761 = vpop.permute.xlu0 %760
        %764 = vset.pattern.permute.xlu0 0
        %765 = vperm.xlu0 %764, %v711
        %v766 = vpop.permute.xlu0 %765
        %769 = vset.pattern.permute.xlu0 0
        %770 = vperm.xlu0 %769, %v712
        %v771 = vpop.permute.xlu0 %770
        %774 = vset.pattern.permute.xlu0 0
        %775 = vperm.xlu0 %774, %v713
        %v776 = vpop.permute.xlu0 %775
        %779 = vset.pattern.permute.xlu0 0
        %780 = vperm.xlu0 %779, %v714
        %v781 = vpop.permute.xlu0 %780
        %784 = vset.pattern.permute.xlu0 0
        %785 = vperm.xlu0 %784, %v715
        %v786 = vpop.permute.xlu0 %785
        %789 = vset.pattern.permute.xlu0 0
        %790 = vperm.xlu0 %789, %v716
        %v791 = vpop.permute.xlu0 %790
        %794 = vset.pattern.permute.xlu0 0
        %795 = vperm.xlu0 %794, %v717
        %v796 = vpop.permute.xlu0 %795
        %799 = vset.pattern.permute.xlu0 0
        %800 = vperm.xlu0 %799, %v718
        %v801 = vpop.permute.xlu0 %800
        %804 = vset.pattern.permute.xlu0 0
        %805 = vperm.xlu0 %804, %v719
        %v806 = vpop.permute.xlu0 %805
        %809 = vset.pattern.permute.xlu0 0
        %810 = vperm.xlu0 %809, %v720
        %v811 = vpop.permute.xlu0 %810
        %814 = vset.pattern.permute.xlu0 0
        %815 = vperm.xlu0 %814, %v721
        %v816 = vpop.permute.xlu0 %815
        %819 = vset.pattern.permute.xlu0 0
        %820 = vperm.xlu0 %819, %v722
        %v821 = vpop.permute.xlu0 %820
        %824 = vset.pattern.permute.xlu0 0
        %825 = vperm.xlu0 %824, %v723
        %v826 = vpop.permute.xlu0 %825
        %829 = vset.pattern.permute.xlu0 0
        %830 = vperm.xlu0 %829, %v724
        %v831 = vpop.permute.xlu0 %830
        %834 = vset.pattern.permute.xlu0 0
        %835 = vperm.xlu0 %834, %v725
        %v836 = vpop.permute.xlu0 %835
        %839 = vset.pattern.permute.xlu0 0
        %840 = vperm.xlu0 %839, %v726
        %v841 = vpop.permute.xlu0 %840
        %844 = vset.pattern.permute.xlu0 0
        %845 = vperm.xlu0 %844, %v727
        %v846 = vpop.permute.xlu0 %845
        %849 = vset.pattern.permute.xlu0 0
        %850 = vperm.xlu0 %849, %v728
        %v851 = vpop.permute.xlu0 %850
        %854 = vset.pattern.permute.xlu0 0
        %855 = vperm.xlu0 %854, %v729
        %v856 = vpop.permute.xlu0 %855
        %859 = vset.pattern.permute.xlu0 0
        %860 = vperm.xlu0 %859, %v730
        %v861 = vpop.permute.xlu0 %860
        %864 = vset.pattern.permute.xlu0 0
        %865 = vperm.xlu0 %864, %v731
        %v866 = vpop.permute.xlu0 %865
        %869 = vset.pattern.permute.xlu0 0
        %870 = vperm.xlu0 %869, %v732
        %v871 = vpop.permute.xlu0 %870
        %874 = vset.pattern.permute.xlu0 0
        %875 = vperm.xlu0 %874, %v733
        %v876 = vpop.permute.xlu0 %875
        %879 = vset.pattern.permute.xlu0 0
        %880 = vperm.xlu0 %879, %v734
        %v881 = vpop.permute.xlu0 %880
        %884 = vset.pattern.permute.xlu0 0
        %885 = vperm.xlu0 %884, %v735
        %v886 = vpop.permute.xlu0 %885
        %889 = vset.pattern.permute.xlu0 0
        %890 = vperm.xlu0 %889, %v736
        %v891 = vpop.permute.xlu0 %890
        %894 = vset.pattern.permute.xlu0 0
        %895 = vperm.xlu0 %894, %v737
        %v896 = vpop.permute.xlu0 %895
        %vm898 = vcmp.gt.f32.partialorder %v578, %v741
        %vm899 = vcmp.gt.f32.partialorder %v579, %v741
        %vm900 = vcmp.gt.f32.partialorder %v580, %v741
        %vm901 = vcmp.gt.f32.partialorder %v581, %v741
        %vm902 = vcmp.gt.f32.partialorder %v582, %v746
        %vm903 = vcmp.gt.f32.partialorder %v583, %v746
        %vm904 = vcmp.gt.f32.partialorder %v584, %v746
        %vm905 = vcmp.gt.f32.partialorder %v585, %v746
        %vm906 = vcmp.gt.f32.partialorder %v586, %v751
        %vm907 = vcmp.gt.f32.partialorder %v587, %v751
        %vm908 = vcmp.gt.f32.partialorder %v588, %v751
        %vm909 = vcmp.gt.f32.partialorder %v589, %v751
        %vm910 = vcmp.gt.f32.partialorder %v590, %v756
        %vm911 = vcmp.gt.f32.partialorder %v591, %v756
        %vm912 = vcmp.gt.f32.partialorder %v592, %v756
        %vm913 = vcmp.gt.f32.partialorder %v593, %v756
        %vm914 = vcmp.gt.f32.partialorder %v594, %v761
        %vm915 = vcmp.gt.f32.partialorder %v595, %v761
        %vm916 = vcmp.gt.f32.partialorder %v596, %v761
        %vm917 = vcmp.gt.f32.partialorder %v597, %v761
        %vm918 = vcmp.gt.f32.partialorder %v598, %v766
        %vm919 = vcmp.gt.f32.partialorder %v599, %v766
        %vm920 = vcmp.gt.f32.partialorder %v600, %v766
        %vm921 = vcmp.gt.f32.partialorder %v601, %v766
        %vm922 = vcmp.gt.f32.partialorder %v602, %v771
        %vm923 = vcmp.gt.f32.partialorder %v603, %v771
        %vm924 = vcmp.gt.f32.partialorder %v604, %v771
        %vm925 = vcmp.gt.f32.partialorder %v605, %v771
        %vm926 = vcmp.gt.f32.partialorder %v606, %v776
        %vm927 = vcmp.gt.f32.partialorder %v607, %v776
        %vm928 = vcmp.gt.f32.partialorder %v608, %v776
        %vm929 = vcmp.gt.f32.partialorder %v609, %v776
        %vm930 = vcmp.gt.f32.partialorder %v610, %v781
        %vm931 = vcmp.gt.f32.partialorder %v611, %v781
        %vm932 = vcmp.gt.f32.partialorder %v612, %v781
        %vm933 = vcmp.gt.f32.partialorder %v613, %v781
        %vm934 = vcmp.gt.f32.partialorder %v614, %v786
        %vm935 = vcmp.gt.f32.partialorder %v615, %v786
        %vm936 = vcmp.gt.f32.partialorder %v616, %v786
        %vm937 = vcmp.gt.f32.partialorder %v617, %v786
        %vm938 = vcmp.gt.f32.partialorder %v618, %v791
        %vm939 = vcmp.gt.f32.partialorder %v619, %v791
        %vm940 = vcmp.gt.f32.partialorder %v620, %v791
        %vm941 = vcmp.gt.f32.partialorder %v621, %v791
        %vm942 = vcmp.gt.f32.partialorder %v622, %v796
        %vm943 = vcmp.gt.f32.partialorder %v623, %v796
        %vm944 = vcmp.gt.f32.partialorder %v624, %v796
        %vm945 = vcmp.gt.f32.partialorder %v625, %v796
        %vm946 = vcmp.gt.f32.partialorder %v626, %v801
        %vm947 = vcmp.gt.f32.partialorder %v627, %v801
        %vm948 = vcmp.gt.f32.partialorder %v628, %v801
        %vm949 = vcmp.gt.f32.partialorder %v629, %v801
        %vm950 = vcmp.gt.f32.partialorder %v630, %v806
        %vm951 = vcmp.gt.f32.partialorder %v631, %v806
        %vm952 = vcmp.gt.f32.partialorder %v632, %v806
        %vm953 = vcmp.gt.f32.partialorder %v633, %v806
        %vm954 = vcmp.gt.f32.partialorder %v634, %v811
        %vm955 = vcmp.gt.f32.partialorder %v635, %v811
        %vm956 = vcmp.gt.f32.partialorder %v636, %v811
        %vm957 = vcmp.gt.f32.partialorder %v637, %v811
        %vm958 = vcmp.gt.f32.partialorder %v638, %v816
        %vm959 = vcmp.gt.f32.partialorder %v639, %v816
        %vm960 = vcmp.gt.f32.partialorder %v640, %v816
        %vm961 = vcmp.gt.f32.partialorder %v641, %v816
        %vm962 = vcmp.gt.f32.partialorder %v642, %v821
        %vm963 = vcmp.gt.f32.partialorder %v643, %v821
        %vm964 = vcmp.gt.f32.partialorder %v644, %v821
        %vm965 = vcmp.gt.f32.partialorder %v645, %v821
        %vm966 = vcmp.gt.f32.partialorder %v646, %v826
        %vm967 = vcmp.gt.f32.partialorder %v647, %v826
        %vm968 = vcmp.gt.f32.partialorder %v648, %v826
        %vm969 = vcmp.gt.f32.partialorder %v649, %v826
        %vm970 = vcmp.gt.f32.partialorder %v650, %v831
        %vm971 = vcmp.gt.f32.partialorder %v651, %v831
        %vm972 = vcmp.gt.f32.partialorder %v652, %v831
        %vm973 = vcmp.gt.f32.partialorder %v653, %v831
        %vm974 = vcmp.gt.f32.partialorder %v654, %v836
        %vm975 = vcmp.gt.f32.partialorder %v655, %v836
        %vm976 = vcmp.gt.f32.partialorder %v656, %v836
        %vm977 = vcmp.gt.f32.partialorder %v657, %v836
        %vm978 = vcmp.gt.f32.partialorder %v658, %v841
        %vm979 = vcmp.gt.f32.partialorder %v659, %v841
        %vm980 = vcmp.gt.f32.partialorder %v660, %v841
        %vm981 = vcmp.gt.f32.partialorder %v661, %v841
        %vm982 = vcmp.gt.f32.partialorder %v662, %v846
        %vm983 = vcmp.gt.f32.partialorder %v663, %v846
        %vm984 = vcmp.gt.f32.partialorder %v664, %v846
        %vm985 = vcmp.gt.f32.partialorder %v665, %v846
        %vm986 = vcmp.gt.f32.partialorder %v666, %v851
        %vm987 = vcmp.gt.f32.partialorder %v667, %v851
        %vm988 = vcmp.gt.f32.partialorder %v668, %v851
        %vm989 = vcmp.gt.f32.partialorder %v669, %v851
        %vm990 = vcmp.gt.f32.partialorder %v670, %v856
        %vm991 = vcmp.gt.f32.partialorder %v671, %v856
        %vm992 = vcmp.gt.f32.partialorder %v672, %v856
        %vm993 = vcmp.gt.f32.partialorder %v673, %v856
        %vm994 = vcmp.gt.f32.partialorder %v674, %v861
        %vm995 = vcmp.gt.f32.partialorder %v675, %v861
        %vm996 = vcmp.gt.f32.partialorder %v676, %v861
        %vm997 = vcmp.gt.f32.partialorder %v677, %v861
        %vm998 = vcmp.gt.f32.partialorder %v678, %v866
        %vm999 = vcmp.gt.f32.partialorder %v679, %v866
        %vm1000 = vcmp.gt.f32.partialorder %v680, %v866
        %vm1001 = vcmp.gt.f32.partialorder %v681, %v866
        %vm1002 = vcmp.gt.f32.partialorder %v682, %v871
        %vm1003 = vcmp.gt.f32.partialorder %v683, %v871
        %vm1004 = vcmp.gt.f32.partialorder %v684, %v871
        %vm1005 = vcmp.gt.f32.partialorder %v685, %v871
        %vm1006 = vcmp.gt.f32.partialorder %v686, %v876
        %vm1007 = vcmp.gt.f32.partialorder %v687, %v876
        %vm1008 = vcmp.gt.f32.partialorder %v688, %v876
        %vm1009 = vcmp.gt.f32.partialorder %v689, %v876
        %vm1010 = vcmp.gt.f32.partialorder %v690, %v881
        %vm1011 = vcmp.gt.f32.partialorder %v691, %v881
        %vm1012 = vcmp.gt.f32.partialorder %v692, %v881
        %vm1013 = vcmp.gt.f32.partialorder %v693, %v881
        %vm1014 = vcmp.gt.f32.partialorder %v694, %v886
        %vm1015 = vcmp.gt.f32.partialorder %v695, %v886
        %vm1016 = vcmp.gt.f32.partialorder %v696, %v886
        %vm1017 = vcmp.gt.f32.partialorder %v697, %v886
        %vm1018 = vcmp.gt.f32.partialorder %v698, %v891
        %vm1019 = vcmp.gt.f32.partialorder %v699, %v891
        %vm1020 = vcmp.gt.f32.partialorder %v700, %v891
        %vm1021 = vcmp.gt.f32.partialorder %v701, %v891
        %vm1022 = vcmp.gt.f32.partialorder %v702, %v896
        %vm1023 = vcmp.gt.f32.partialorder %v703, %v896
        %vm1024 = vcmp.gt.f32.partialorder %v704, %v896
        %vm1025 = vcmp.gt.f32.partialorder %v705, %v896
        %v1026 = vsel %vm898, 1.0, 0.0
        %v1027 = vsel %vm899, 1.0, 0.0
        %v1028 = vsel %vm900, 1.0, 0.0
        %v1029 = vsel %vm901, 1.0, 0.0
        %v1030 = vsel %vm902, 1.0, 0.0
        %v1031 = vsel %vm903, 1.0, 0.0
        %v1032 = vsel %vm904, 1.0, 0.0
        %v1033 = vsel %vm905, 1.0, 0.0
        %v1034 = vsel %vm906, 1.0, 0.0
        %v1035 = vsel %vm907, 1.0, 0.0
        %v1036 = vsel %vm908, 1.0, 0.0
        %v1037 = vsel %vm909, 1.0, 0.0
        %v1038 = vsel %vm910, 1.0, 0.0
        %v1039 = vsel %vm911, 1.0, 0.0
        %v1040 = vsel %vm912, 1.0, 0.0
        %v1041 = vsel %vm913, 1.0, 0.0
        %v1042 = vsel %vm914, 1.0, 0.0
        %v1043 = vsel %vm915, 1.0, 0.0
        %v1044 = vsel %vm916, 1.0, 0.0
        %v1045 = vsel %vm917, 1.0, 0.0
        %v1046 = vsel %vm918, 1.0, 0.0
        %v1047 = vsel %vm919, 1.0, 0.0
        %v1048 = vsel %vm920, 1.0, 0.0
        %v1049 = vsel %vm921, 1.0, 0.0
        %v1050 = vsel %vm922, 1.0, 0.0
        %v1051 = vsel %vm923, 1.0, 0.0
        %v1052 = vsel %vm924, 1.0, 0.0
        %v1053 = vsel %vm925, 1.0, 0.0
        %v1054 = vsel %vm926, 1.0, 0.0
        %v1055 = vsel %vm927, 1.0, 0.0
        %v1056 = vsel %vm928, 1.0, 0.0
        %v1057 = vsel %vm929, 1.0, 0.0
        %v1058 = vsel %vm930, 1.0, 0.0
        %v1059 = vsel %vm931, 1.0, 0.0
        %v1060 = vsel %vm932, 1.0, 0.0
        %v1061 = vsel %vm933, 1.0, 0.0
        %v1062 = vsel %vm934, 1.0, 0.0
        %v1063 = vsel %vm935, 1.0, 0.0
        %v1064 = vsel %vm936, 1.0, 0.0
        %v1065 = vsel %vm937, 1.0, 0.0
        %v1066 = vsel %vm938, 1.0, 0.0
        %v1067 = vsel %vm939, 1.0, 0.0
        %v1068 = vsel %vm940, 1.0, 0.0
        %v1069 = vsel %vm941, 1.0, 0.0
        %v1070 = vsel %vm942, 1.0, 0.0
        %v1071 = vsel %vm943, 1.0, 0.0
        %v1072 = vsel %vm944, 1.0, 0.0
        %v1073 = vsel %vm945, 1.0, 0.0
        %v1074 = vsel %vm946, 1.0, 0.0
        %v1075 = vsel %vm947, 1.0, 0.0
        %v1076 = vsel %vm948, 1.0, 0.0
        %v1077 = vsel %vm949, 1.0, 0.0
        %v1078 = vsel %vm950, 1.0, 0.0
        %v1079 = vsel %vm951, 1.0, 0.0
        %v1080 = vsel %vm952, 1.0, 0.0
        %v1081 = vsel %vm953, 1.0, 0.0
        %v1082 = vsel %vm954, 1.0, 0.0
        %v1083 = vsel %vm955, 1.0, 0.0
        %v1084 = vsel %vm956, 1.0, 0.0
        %v1085 = vsel %vm957, 1.0, 0.0
        %v1086 = vsel %vm958, 1.0, 0.0
        %v1087 = vsel %vm959, 1.0, 0.0
        %v1088 = vsel %vm960, 1.0, 0.0
        %v1089 = vsel %vm961, 1.0, 0.0
        %v1090 = vsel %vm962, 1.0, 0.0
        %v1091 = vsel %vm963, 1.0, 0.0
        %v1092 = vsel %vm964, 1.0, 0.0
        %v1093 = vsel %vm965, 1.0, 0.0
        %v1094 = vsel %vm966, 1.0, 0.0
        %v1095 = vsel %vm967, 1.0, 0.0
        %v1096 = vsel %vm968, 1.0, 0.0
        %v1097 = vsel %vm969, 1.0, 0.0
        %v1098 = vsel %vm970, 1.0, 0.0
        %v1099 = vsel %vm971, 1.0, 0.0
        %v1100 = vsel %vm972, 1.0, 0.0
        %v1101 = vsel %vm973, 1.0, 0.0
        %v1102 = vsel %vm974, 1.0, 0.0
        %v1103 = vsel %vm975, 1.0, 0.0
        %v1104 = vsel %vm976, 1.0, 0.0
        %v1105 = vsel %vm977, 1.0, 0.0
        %v1106 = vsel %vm978, 1.0, 0.0
        %v1107 = vsel %vm979, 1.0, 0.0
        %v1108 = vsel %vm980, 1.0, 0.0
        %v1109 = vsel %vm981, 1.0, 0.0
        %v1110 = vsel %vm982, 1.0, 0.0
        %v1111 = vsel %vm983, 1.0, 0.0
        %v1112 = vsel %vm984, 1.0, 0.0
        %v1113 = vsel %vm985, 1.0, 0.0
        %v1114 = vsel %vm986, 1.0, 0.0
        %v1115 = vsel %vm987, 1.0, 0.0
        %v1116 = vsel %vm988, 1.0, 0.0
        %v1117 = vsel %vm989, 1.0, 0.0
        %v1118 = vsel %vm990, 1.0, 0.0
        %v1119 = vsel %vm991, 1.0, 0.0
        %v1120 = vsel %vm992, 1.0, 0.0
        %v1121 = vsel %vm993, 1.0, 0.0
        %v1122 = vsel %vm994, 1.0, 0.0
        %v1123 = vsel %vm995, 1.0, 0.0
        %v1124 = vsel %vm996, 1.0, 0.0
        %v1125 = vsel %vm997, 1.0, 0.0
        %v1126 = vsel %vm998, 1.0, 0.0
        %v1127 = vsel %vm999, 1.0, 0.0
        %v1128 = vsel %vm1000, 1.0, 0.0
        %v1129 = vsel %vm1001, 1.0, 0.0
        %v1130 = vsel %vm1002, 1.0, 0.0
        %v1131 = vsel %vm1003, 1.0, 0.0
        %v1132 = vsel %vm1004, 1.0, 0.0
        %v1133 = vsel %vm1005, 1.0, 0.0
        %v1134 = vsel %vm1006, 1.0, 0.0
        %v1135 = vsel %vm1007, 1.0, 0.0
        %v1136 = vsel %vm1008, 1.0, 0.0
        %v1137 = vsel %vm1009, 1.0, 0.0
        %v1138 = vsel %vm1010, 1.0, 0.0
        %v1139 = vsel %vm1011, 1.0, 0.0
        %v1140 = vsel %vm1012, 1.0, 0.0
        %v1141 = vsel %vm1013, 1.0, 0.0
        %v1142 = vsel %vm1014, 1.0, 0.0
        %v1143 = vsel %vm1015, 1.0, 0.0
        %v1144 = vsel %vm1016, 1.0, 0.0
        %v1145 = vsel %vm1017, 1.0, 0.0
        %v1146 = vsel %vm1018, 1.0, 0.0
        %v1147 = vsel %vm1019, 1.0, 0.0
        %v1148 = vsel %vm1020, 1.0, 0.0
        %v1149 = vsel %vm1021, 1.0, 0.0
        %v1150 = vsel %vm1022, 1.0, 0.0
        %v1151 = vsel %vm1023, 1.0, 0.0
        %v1152 = vsel %vm1024, 1.0, 0.0
        %v1153 = vsel %vm1025, 1.0, 0.0
        %1154 = vst [vmem:[%s241] sm:$0xff] %v1026
        %1155 = vst [vmem:[%s241 + $0x8] sm:$0xff] %v1027
        %1156 = vst [vmem:[%s241 + $0x10] sm:$0xff] %v1028
        %1157 = vst [vmem:[%s241 + $0x18] sm:$0xff] %v1029
        %1158 = vst [vmem:[%s241 + $0x20] sm:$0xff] %v1030
        %1159 = vst [vmem:[%s241 + $0x28] sm:$0xff] %v1031
        %1160 = vst [vmem:[%s241 + $0x30] sm:$0xff] %v1032
        %1161 = vst [vmem:[%s241 + $0x38] sm:$0xff] %v1033
        %1162 = vst [vmem:[%s241 + $0x40] sm:$0xff] %v1034
        %1163 = vst [vmem:[%s241 + $0x48] sm:$0xff] %v1035
        %1164 = vst [vmem:[%s241 + $0x50] sm:$0xff] %v1036
        %1165 = vst [vmem:[%s241 + $0x58] sm:$0xff] %v1037
        %1166 = vst [vmem:[%s241 + $0x60] sm:$0xff] %v1038
        %1167 = vst [vmem:[%s241 + $0x68] sm:$0xff] %v1039
        %1168 = vst [vmem:[%s241 + $0x70] sm:$0xff] %v1040
        %1169 = vst [vmem:[%s241 + $0x78] sm:$0xff] %v1041
        %1170 = vst [vmem:[%s241 + $0x80] sm:$0xff] %v1042
        %1171 = vst [vmem:[%s241 + $0x88] sm:$0xff] %v1043
        %1172 = vst [vmem:[%s241 + $0x90] sm:$0xff] %v1044
        %1173 = vst [vmem:[%s241 + $0x98] sm:$0xff] %v1045
        %1174 = vst [vmem:[%s241 + $0xa0] sm:$0xff] %v1046
        %1175 = vst [vmem:[%s241 + $0xa8] sm:$0xff] %v1047
        %1176 = vst [vmem:[%s241 + $0xb0] sm:$0xff] %v1048
        %1177 = vst [vmem:[%s241 + $0xb8] sm:$0xff] %v1049
        %1178 = vst [vmem:[%s241 + $0xc0] sm:$0xff] %v1050
        %1179 = vst [vmem:[%s241 + $0xc8] sm:$0xff] %v1051
        %1180 = vst [vmem:[%s241 + $0xd0] sm:$0xff] %v1052
        %1181 = vst [vmem:[%s241 + $0xd8] sm:$0xff] %v1053
        %1182 = vst [vmem:[%s241 + $0xe0] sm:$0xff] %v1054
        %1183 = vst [vmem:[%s241 + $0xe8] sm:$0xff] %v1055
        %1184 = vst [vmem:[%s241 + $0xf0] sm:$0xff] %v1056
        %1185 = vst [vmem:[%s241 + $0xf8] sm:$0xff] %v1057
        %1186 = vst [vmem:[%s241 + $0x100] sm:$0xff] %v1058
        %1187 = vst [vmem:[%s241 + $0x108] sm:$0xff] %v1059
        %1188 = vst [vmem:[%s241 + $0x110] sm:$0xff] %v1060
        %1189 = vst [vmem:[%s241 + $0x118] sm:$0xff] %v1061
        %1190 = vst [vmem:[%s241 + $0x120] sm:$0xff] %v1062
        %1191 = vst [vmem:[%s241 + $0x128] sm:$0xff] %v1063
        %1192 = vst [vmem:[%s241 + $0x130] sm:$0xff] %v1064
        %1193 = vst [vmem:[%s241 + $0x138] sm:$0xff] %v1065
        %1194 = vst [vmem:[%s241 + $0x140] sm:$0xff] %v1066
        %1195 = vst [vmem:[%s241 + $0x148] sm:$0xff] %v1067
        %1196 = vst [vmem:[%s241 + $0x150] sm:$0xff] %v1068
        %1197 = vst [vmem:[%s241 + $0x158] sm:$0xff] %v1069
        %1198 = vst [vmem:[%s241 + $0x160] sm:$0xff] %v1070
        %1199 = vst [vmem:[%s241 + $0x168] sm:$0xff] %v1071
        %1200 = vst [vmem:[%s241 + $0x170] sm:$0xff] %v1072
        %1201 = vst [vmem:[%s241 + $0x178] sm:$0xff] %v1073
        %1202 = vst [vmem:[%s241 + $0x180] sm:$0xff] %v1074
        %1203 = vst [vmem:[%s241 + $0x188] sm:$0xff] %v1075
        %1204 = vst [vmem:[%s241 + $0x190] sm:$0xff] %v1076
        %1205 = vst [vmem:[%s241 + $0x198] sm:$0xff] %v1077
        %1206 = vst [vmem:[%s241 + $0x1a0] sm:$0xff] %v1078
        %1207 = vst [vmem:[%s241 + $0x1a8] sm:$0xff] %v1079
        %1208 = vst [vmem:[%s241 + $0x1b0] sm:$0xff] %v1080
        %1209 = vst [vmem:[%s241 + $0x1b8] sm:$0xff] %v1081
        %1210 = vst [vmem:[%s241 + $0x1c0] sm:$0xff] %v1082
        %1211 = vst [vmem:[%s241 + $0x1c8] sm:$0xff] %v1083
        %1212 = vst [vmem:[%s241 + $0x1d0] sm:$0xff] %v1084
        %1213 = vst [vmem:[%s241 + $0x1d8] sm:$0xff] %v1085
        %1214 = vst [vmem:[%s241 + $0x1e0] sm:$0xff] %v1086
        %1215 = vst [vmem:[%s241 + $0x1e8] sm:$0xff] %v1087
        %1216 = vst [vmem:[%s241 + $0x1f0] sm:$0xff] %v1088
        %1217 = vst [vmem:[%s241 + $0x1f8] sm:$0xff] %v1089
        %1218 = vst [vmem:[%s241 + $0x200] sm:$0xff] %v1090
        %1219 = vst [vmem:[%s241 + $0x208] sm:$0xff] %v1091
        %1220 = vst [vmem:[%s241 + $0x210] sm:$0xff] %v1092
        %1221 = vst [vmem:[%s241 + $0x218] sm:$0xff] %v1093
        %1222 = vst [vmem:[%s241 + $0x220] sm:$0xff] %v1094
        %1223 = vst [vmem:[%s241 + $0x228] sm:$0xff] %v1095
        %1224 = vst [vmem:[%s241 + $0x230] sm:$0xff] %v1096
        %1225 = vst [vmem:[%s241 + $0x238] sm:$0xff] %v1097
        %1226 = vst [vmem:[%s241 + $0x240] sm:$0xff] %v1098
        %1227 = vst [vmem:[%s241 + $0x248] sm:$0xff] %v1099
        %1228 = vst [vmem:[%s241 + $0x250] sm:$0xff] %v1100
        %1229 = vst [vmem:[%s241 + $0x258] sm:$0xff] %v1101
        %1230 = vst [vmem:[%s241 + $0x260] sm:$0xff] %v1102
        %1231 = vst [vmem:[%s241 + $0x268] sm:$0xff] %v1103
        %1232 = vst [vmem:[%s241 + $0x270] sm:$0xff] %v1104
        %1233 = vst [vmem:[%s241 + $0x278] sm:$0xff] %v1105
        %1234 = vst [vmem:[%s241 + $0x280] sm:$0xff] %v1106
        %1235 = vst [vmem:[%s241 + $0x288] sm:$0xff] %v1107
        %1236 = vst [vmem:[%s241 + $0x290] sm:$0xff] %v1108
        %1237 = vst [vmem:[%s241 + $0x298] sm:$0xff] %v1109
        %1238 = vst [vmem:[%s241 + $0x2a0] sm:$0xff] %v1110
        %1239 = vst [vmem:[%s241 + $0x2a8] sm:$0xff] %v1111
        %1240 = vst [vmem:[%s241 + $0x2b0] sm:$0xff] %v1112
        %1241 = vst [vmem:[%s241 + $0x2b8] sm:$0xff] %v1113
        %1242 = vst [vmem:[%s241 + $0x2c0] sm:$0xff] %v1114
        %1243 = vst [vmem:[%s241 + $0x2c8] sm:$0xff] %v1115
        %1244 = vst [vmem:[%s241 + $0x2d0] sm:$0xff] %v1116
        %1245 = vst [vmem:[%s241 + $0x2d8] sm:$0xff] %v1117
        %1246 = vst [vmem:[%s241 + $0x2e0] sm:$0xff] %v1118
        %1247 = vst [vmem:[%s241 + $0x2e8] sm:$0xff] %v1119
        %1248 = vst [vmem:[%s241 + $0x2f0] sm:$0xff] %v1120
        %1249 = vst [vmem:[%s241 + $0x2f8] sm:$0xff] %v1121
        %1250 = vst [vmem:[%s241 + $0x300] sm:$0xff] %v1122
        %1251 = vst [vmem:[%s241 + $0x308] sm:$0xff] %v1123
        %1252 = vst [vmem:[%s241 + $0x310] sm:$0xff] %v1124
        %1253 = vst [vmem:[%s241 + $0x318] sm:$0xff] %v1125
        %1254 = vst [vmem:[%s241 + $0x320] sm:$0xff] %v1126
        %1255 = vst [vmem:[%s241 + $0x328] sm:$0xff] %v1127
        %1256 = vst [vmem:[%s241 + $0x330] sm:$0xff] %v1128
        %1257 = vst [vmem:[%s241 + $0x338] sm:$0xff] %v1129
        %1258 = vst [vmem:[%s241 + $0x340] sm:$0xff] %v1130
        %1259 = vst [vmem:[%s241 + $0x348] sm:$0xff] %v1131
        %1260 = vst [vmem:[%s241 + $0x350] sm:$0xff] %v1132
        %1261 = vst [vmem:[%s241 + $0x358] sm:$0xff] %v1133
        %1262 = vst [vmem:[%s241 + $0x360] sm:$0xff] %v1134
        %1263 = vst [vmem:[%s241 + $0x368] sm:$0xff] %v1135
        %1264 = vst [vmem:[%s241 + $0x370] sm:$0xff] %v1136
        %1265 = vst [vmem:[%s241 + $0x378] sm:$0xff] %v1137
        %1266 = vst [vmem:[%s241 + $0x380] sm:$0xff] %v1138
        %1267 = vst [vmem:[%s241 + $0x388] sm:$0xff] %v1139
        %1268 = vst [vmem:[%s241 + $0x390] sm:$0xff] %v1140
        %1269 = vst [vmem:[%s241 + $0x398] sm:$0xff] %v1141
        %1270 = vst [vmem:[%s241 + $0x3a0] sm:$0xff] %v1142
        %1271 = vst [vmem:[%s241 + $0x3a8] sm:$0xff] %v1143
        %1272 = vst [vmem:[%s241 + $0x3b0] sm:$0xff] %v1144
        %1273 = vst [vmem:[%s241 + $0x3b8] sm:$0xff] %v1145
        %1274 = vst [vmem:[%s241 + $0x3c0] sm:$0xff] %v1146
        %1275 = vst [vmem:[%s241 + $0x3c8] sm:$0xff] %v1147
        %1276 = vst [vmem:[%s241 + $0x3d0] sm:$0xff] %v1148
        %1277 = vst [vmem:[%s241 + $0x3d8] sm:$0xff] %v1149
        %1278 = vst [vmem:[%s241 + $0x3e0] sm:$0xff] %v1150
        %1279 = vst [vmem:[%s241 + $0x3e8] sm:$0xff] %v1151
        %1280 = vst [vmem:[%s241 + $0x3f0] sm:$0xff] %v1152
        %1281 = vst [vmem:[%s241 + $0x3f8] sm:$0xff] %v1153
        %s1282 = sand.u32 %s122, 1
        %s1283 = scalar_lea.sflag [#allocation4], %s1282
        %s1284 = sand.u32 %s122, 1
        %s1285 = smul.addr %s1284, 1024
        %s1286 = scalar_lea.vmem [#allocation5], %s1285
        // Predicated region
        $region37: #{tpu_custom_call.1} parent=31 // pred_check
          %p1287 = pneg %p132
        $region38: #{tpu_custom_call.1} parent=31 // pred_check_branch
          %1289 = sbr.rel (%p1287) target = $region40
        $region39: #{tpu_custom_call.1} parent=31 // pred_region
          %s1290 = smul.u32 32, %s24
          %s1291 = smul.u32 4, %s25
          %1293 = vsyncadd %s1283, 0
          %s1294 = smul.addr %s1290, 4
          %s1295 = sadd.s32 %s1291, %s1294
          %s1296 = smul.addr %s1295, 8
          %s1297 = scalar_lea.hbm %s3, %s1296
          %s1298 = sshll.u32 %s1286, 4
          %s1299 = int_to_ptr.vmem [resolvable:$true] %s1298
          %s1300 = sshll.u32 %s1297, 4
          %s1301 = int_to_ptr.hbm [resolvable:$true] %s1300
          %1306 = dma.vmem_to_hbm [thread:$0]  %s1299, 16384, %s1301, %s1283, 512, 512, 32
        $region40: #{tpu_custom_call.1} parent=31 // pred_fallthru
          _
      $region32: #{tpu_custom_call.1} parent=5 // pred_fallthru
        _
      %p1307 = scmp.le.s32.totalorder 2, %s15
      // Predicated region
      $region41: #{tpu_custom_call.1} parent=5 // pred_check
        %p1308 = pneg %p1307
      $region42: #{tpu_custom_call.1} parent=5 // pred_check_branch
        %1310 = sbr.rel (%p1308) target = $region44
      $region43: #{tpu_custom_call.1} parent=5 // pred_region
        %s1311 = ssub.s32 %s15, 2
        // Predicated region
        $region45: #{tpu_custom_call.1} parent=43 // pred_check
          %p1312 = pneg %p138
        $region46: #{tpu_custom_call.1} parent=43 // pred_check_branch
          %1314 = sbr.rel (%p1312) target = $region48
        $region47: #{tpu_custom_call.1} parent=43 // pred_region
          %s1315 = sand.u32 %s123, 1
          %s1316 = scalar_lea.sflag [#allocation4], %s1315
          %s1317 = sand.u32 %s123, 1
          %s1318 = smul.addr %s1317, 1024
          %s1319 = scalar_lea.vmem [#allocation5], %s1318
          %1321 = dma.done %s1316, 16384
        $region48: #{tpu_custom_call.1} parent=43 // pred_fallthru
          _
      $region44: #{tpu_custom_call.1} parent=5 // pred_fallthru
        _
    $region6: #{tpu_custom_call.1} parent=1 // loop_footer
      %s19 = sadd.s32 1, %s15
    $region7: #{tpu_custom_call.1} parent=1 // loop_footer_branch
      %14 = sbr.rel target = $region3
    $region8: #{tpu_custom_call.1} parent=1 // loop_exit
      _
    %1322 = vsyncpa [#allocation3], 1
    %s1323 = scalar_lea.sflag [#allocation3], 1
    %1324 = vsyncpa %s1323, 1
    %1325 = vsyncpa [#allocation4], 1
    %s1326 = scalar_lea.sflag [#allocation4], 1
    %1327 = vsyncpa %s1326, 1

</llo_original>
